<compile_context>
chip_gen: v7x
topology: tpu7x:2x2x1
jax: 0.10.0
libtpu: 0.0.40
codegen_flags: <defaults>
</compile_context>

<pallas_src>
import jax
import jax.numpy as jnp
from jax.experimental import pallas as pl
from jax.experimental.pallas import tpu as pltpu

LANE = 128


# ----------------------------- kernel -------------------------------------- #

def _patch_embed_kernel(p_ref, w_ref, b_ref, o_ref):
    """p: (BB, K, TN) bf16; w: (E, K) bf16; b: (E, 1) f32; o: (BB, E, TN) f32."""
    bb, _, tn = p_ref.shape
    e = w_ref.shape[0]
    w = w_ref[...]
    b = jnp.broadcast_to(b_ref[...], (e, tn))           # hoisted out of the loop
    for i in range(bb):                                  # static, fully unrolled
        y = jnp.dot(w, p_ref[i], preferred_element_type=jnp.float32) + b
        o_ref[i] = y.astype(o_ref.dtype)


# ----------------------------- wrapper -------------------------------------- #

def patch_embed_forward(x_nchw, weight, bias, patch_size, *,
                        images_per_block=None, lane_tile=None):
    """x: (B, C, H, W); weight: (E, C, P, P); bias: (E,) -> (B, E, H/P, W/P)."""
    B, C, H, W = x_nchw.shape
    E = weight.shape[0]
    P = patch_size
    assert H % P == 0 and W % P == 0, "image size must be divisible by patch size"
    Hp, Wp = H // P, W // P
    Np = Hp * Wp
    K = C * P * P

    # --- lane-dense tiling of the patch axis --------------------------------
    Np_pad = -(-Np // LANE) * LANE                       # round up to 128
    if lane_tile is None:
        lane_tile = 256 if Np_pad % 256 == 0 else LANE   # 256-wide MXU on v6e/v7x
    TN = lane_tile
    assert Np_pad % TN == 0

    # --- images per grid step (amortize per-step overhead) ------------------
    if images_per_block is None:
        images_per_block = min(4, B)
        # Keep >= 2 steps on the (parallel) batch axis when possible so both
        # v7x TensorCores get work even when Np fits in a single lane tile.
        if B >= 2 and B // images_per_block < 2:
            images_per_block = max(1, B // 2)
    BB = images_per_block
    while B % BB:
        BB -= 1

    # --- im2col (stride == kernel) + bf16 cast -------------------------------
    # (B,C,H,W) -> (B,C,Hp,P,Wp,P) -> (B, c,kh,kw, hp,wp) -> (B, K, Np)
    # K order (c, kh, kw) matches weight.reshape(E, K); Np order (hp, wp)
    # matches NCHW output, so there is NO output-side transpose.
    xb = x_nchw.astype(jnp.bfloat16)
    patches = xb.reshape(B, C, Hp, P, Wp, P)
    patches = jnp.transpose(patches, (0, 1, 3, 5, 2, 4)).reshape(B, K, Np)
    if Np_pad != Np:
        patches = jnp.pad(patches, ((0, 0), (0, 0), (0, Np_pad - Np)))

    w_flat = weight.reshape(E, K).astype(jnp.bfloat16)
    b_col = bias.reshape(E, 1).astype(jnp.float32)

    grid = (B // BB, Np_pad // TN)

    out = pl.pallas_call(
        _patch_embed_kernel,
        out_shape=jax.ShapeDtypeStruct((B, E, Np_pad), jnp.float32),
        grid_spec=pltpu.PrefetchScalarGridSpec(
            num_scalar_prefetch=0,
            grid=grid,
            in_specs=[
                pl.BlockSpec((BB, K, TN), lambda b, n: (b, 0, n)),   # patches
                pl.BlockSpec((E, K), lambda b, n: (0, 0)),           # weight (resident)
                pl.BlockSpec((E, 1), lambda b, n: (0, 0)),           # bias   (resident)
            ],
            out_specs=pl.BlockSpec((BB, E, TN), lambda b, n: (b, 0, n)),
        ),
        compiler_params=pltpu.CompilerParams(
            dimension_semantics=("parallel", "parallel")),
    )(patches, w_flat, b_col)

    if Np_pad != Np:
        out = out[:, :, :Np]
    return out.reshape(B, E, Hp, Wp)


# ------------------------ pure-JAX reference -------------------------------- #

def _ref_patch_embed(x, weight, bias, P):
    y = jax.lax.conv_general_dilated(
        x, weight, window_strides=(P, P), padding="VALID",
        dimension_numbers=("NCHW", "OIHW", "NCHW"))
    return y + bias.reshape(1, -1, 1, 1)


# ------------------------------- main --------------------------------------- #

if __name__ == "__main__":
    # PatchEmbed(img_size=16, patch_size=4, in_chans=4, embed_dim=32)
    B, C, H, W = 2, 4, 16, 16
    P, E = 4, 32

    key = jax.random.PRNGKey(0)
    kx, kw, kb = jax.random.split(key, 3)
    x = jax.random.normal(kx, (B, C, H, W), jnp.float32)
    weight = jax.random.normal(kw, (E, C, P, P), jnp.float32) / (C * P * P) ** 0.5
    bias = 0.02 * jax.random.normal(kb, (E,), jnp.float32)

    out = jax.block_until_ready(patch_embed_forward(x, weight, bias, P))
    ref = jax.block_until_ready(_ref_patch_embed(x, weight, bias, P))

    assert out.shape == (B, E, H // P, W // P) and out.dtype == jnp.float32
    # bf16 operands (f32 accumulate) vs f32 conv reference -> ~1e-2-level error.
    assert jnp.allclose(out, ref, atol=3e-2, rtol=3e-2), (
        float(jnp.max(jnp.abs(out - ref))))
    print("KERNEL_OK")
</pallas_src>

<mosaic_0001>
module attributes {stable_mosaic.version = 11 : i64} {
  func.func @_patch_embed_kernel(%arg0: i32, %arg1: i32, %arg2: memref<1x64x128xbf16, #tpu.memory_space<vmem>>, %arg3: memref<32x64xbf16, #tpu.memory_space<vmem>>, %arg4: memref<32x1xf32, #tpu.memory_space<vmem>>, %arg5: memref<1x32x128xf32, #tpu.memory_space<vmem>>) attributes {dimension_semantics = [#tpu.dimension_semantics<parallel>, #tpu.dimension_semantics<parallel>], iteration_bounds = array<i64: 2, 1>, scalar_prefetch = 0 : i64, scratch_operands = 0 : i64, tpu.core_type = #tpu.core_type<tc>, window_params = [{transform_indices = @transform_0, window_bounds = array<i64: 1, 64, 128>}, {pipeline_mode = #tpu.pipeline_mode<synchronous>, transform_indices = @transform_1, window_bounds = array<i64: 32, 64>}, {pipeline_mode = #tpu.pipeline_mode<synchronous>, transform_indices = @transform_2, window_bounds = array<i64: 32, 1>}, {transform_indices = @transform_3, window_bounds = array<i64: 1, 32, 128>}]} {
    %c0 = arith.constant 0 : index
    %c0_0 = arith.constant 0 : index
    %0 = vector.load %arg3[%c0, %c0_0] : memref<32x64xbf16, #tpu.memory_space<vmem>>, vector<32x64xbf16>
    %c0_1 = arith.constant 0 : index
    %c0_2 = arith.constant 0 : index
    %1 = vector.load %arg4[%c0_1, %c0_2] : memref<32x1xf32, #tpu.memory_space<vmem>>, vector<32x1xf32>
    %2 = vector.shape_cast %1 : vector<32x1xf32> to vector<32x1xf32>
    %3 = vector.broadcast %2 : vector<32x1xf32> to vector<32x128xf32>
    %c0_3 = arith.constant 0 : index
    %c0_4 = arith.constant 0 : index
    %c0_5 = arith.constant 0 : index
    %4 = vector.load %arg2[%c0_3, %c0_4, %c0_5] : memref<1x64x128xbf16, #tpu.memory_space<vmem>>, vector<1x64x128xbf16>
    %5 = vector.shape_cast %4 : vector<1x64x128xbf16> to vector<64x128xbf16>
    %cst = arith.constant dense<0.000000e+00> : vector<32x128xf32>
    %6 = tpu.matmul %0, %5, %cst {dimension_numbers = #tpu.dot_dimension_numbers<[1], [0], [0], [1], [0, 0, 1, 1], [], []>} : vector<32x64xbf16>, vector<64x128xbf16>, vector<32x128xf32> -> vector<32x128xf32>
    %7 = arith.addf %6, %3 : vector<32x128xf32>
    %c0_6 = arith.constant 0 : index
    %c0_7 = arith.constant 0 : index
    %c0_8 = arith.constant 0 : index
    %8 = vector.load %arg5[%c0_6, %c0_7, %c0_8] : memref<1x32x128xf32, #tpu.memory_space<vmem>>, vector<1x32x128xf32>
    %9 = vector.shape_cast %8 : vector<1x32x128xf32> to vector<32x128xf32>
    %10 = vector.shape_cast %7 : vector<32x128xf32> to vector<1x32x128xf32>
    tpu.vector_store %arg5[%c0_6, %c0_7, %c0_8], %10 {strides = array<i32>} : memref<1x32x128xf32, #tpu.memory_space<vmem>>, vector<1x32x128xf32>,
    return
  }
  func.func @transform_0(%arg0: i32, %arg1: i32) -> (i32, i32, i32) {
    %c0_i32 = arith.constant 0 : i32
    %c0_i32_0 = arith.constant 0 : i32
    return %arg0, %c0_i32, %arg1 : i32, i32, i32
  }
  func.func @transform_1(%arg0: i32, %arg1: i32) -> (i32, i32) {
    %c0_i32 = arith.constant 0 : i32
    %c0_i32_0 = arith.constant 0 : i32
    %c0_i32_1 = arith.constant 0 : i32
    return %c0_i32, %c0_i32_0 : i32, i32
  }
  func.func @transform_2(%arg0: i32, %arg1: i32) -> (i32, i32) {
    %c0_i32 = arith.constant 0 : i32
    %c0_i32_0 = arith.constant 0 : i32
    %c0_i32_1 = arith.constant 0 : i32
    return %c0_i32, %c0_i32_0 : i32, i32
  }
  func.func @transform_3(%arg0: i32, %arg1: i32) -> (i32, i32, i32) {
    %c0_i32 = arith.constant 0 : i32
    %c0_i32_0 = arith.constant 0 : i32
    return %arg0, %c0_i32, %arg1 : i32, i32, i32
  }
}

</mosaic_0001>

<llo_original>
// kernel: tpu_custom_call.1
$region0: #{tpu_custom_call.1}
  #allocation0 [shape = 'u32[]', space=smem, size = 0x4, offset = 0x4, fixed_abs, tag = 'smem constant byte address 0x4 - core index']
  #allocation1 [shape = 'u32[144,128]{1,0:T(1,128)}', space=vmem, size = 0x12000, scoped, tag = 'internal scratch']
  %s0 = inlined_call_operand.hbm [shape: bf16[2,64,128], index: 0, kind: input, shape index: {}]
  %s1 = inlined_call_operand.vmem [shape: bf16[32,64], index: 1, kind: input, shape index: {}]
  %s2 = inlined_call_operand.vmem [shape: f32[32,1], index: 2, kind: input, shape index: {}]
  %s3 = inlined_call_operand.hbm [shape: f32[2,32,128], index: 3, kind: output, shape index: {}]
  %s4 = sld [smem:[#allocation0]]
  $region49: #{tpu_custom_call.1} parent=0
    _
  %s6 = ssub.s32 1, %s4
  %s7 = scalar_select 0, %s6, %s4
  $region1: #{tpu_custom_call.1} parent=0
    #allocation2 [shape = 'u8[32768]{0}', space=vmem, size = 0x8000, scoped, tag = 'input window, operand 0']
    #allocation3 [shape = 's32[2]{0}', space=sflag, size = 0x8, scoped, tag = 'scoped memory for tpu_custom_call.1']
    #allocation4 [shape = 's32[2]{0}', space=sflag, size = 0x8, scoped, tag = 'scoped memory for tpu_custom_call.1']
    #allocation5 [shape = 'u8[32768]{0}', space=vmem, size = 0x8000, scoped, tag = 'output window, operand 0']
    %8 = vsyncpa [#allocation3], 0
    %s9 = scalar_lea.sflag [#allocation3], 1
    %10 = vsyncpa %s9, 0
    %11 = vsyncpa [#allocation4], 0
    %s12 = scalar_lea.sflag [#allocation4], 1
    %13 = vsyncpa %s12, 0
    loop: start=0, step=1, limit=4
    $region2: #{tpu_custom_call.1} parent=1 // loop_pre_header
      _
    $region3: #{tpu_custom_call.1} parent=1 // loop_header
      %s15 = sphi 0, %s19
      %p16 = scmp.ge.s32.totalorder %s15, 4
      %s22 = sphi 0, %s34
      %s23 = sphi 0, %s30
      %s24 = sphi 0, %s22
      %s25 = sphi 0, %s23
      %s26 = sphi 0, %s24
      %s27 = sphi 0, %s25
      %s39 = sphi 0, %s41
      %s42 = sphi 0, %s39
      %s43 = sphi 0, %s42
      %s59 = sphi 0, %s43
      %s63 = sphi 0, %s63
      %s65 = sphi 0, %s63
      %s66 = sphi 0, %s65
      %s80 = sphi 0, %s66
      %s84 = sphi 0, %s84
      %s86 = sphi 0, %s84
      %s87 = sphi 0, %s86
      %s101 = sphi 0, %s87
      %s109 = sphi 0, %s111
      %s112 = sphi 0, %s109
      %s113 = sphi 0, %s112
      %s129 = sphi 0, %s113
    $region4: #{tpu_custom_call.1} parent=1 // loop_header_branch
      %18 = sbr.rel (%p16) target = $region8
    $region5: #{tpu_custom_call.1} parent=1 // loop_body
      %s20 = ssub.s32 %s15, 1
      %s21 = ssub.s32 %s15, 2
      %s28 = sadd.s32 1, %s23
      %p29 = scmp.ge.s32.totalorder %s28, 1
      %s30 = scalar_select %p29, 0, %s28
      %s31 = sadd.s32 1, %s22
      %s32 = scalar_select %p29, %s31, %s22
      %p33 = scmp.ge.s32.totalorder %s32, 2
      %s34 = scalar_select %p33, 0, %s32
      %s35 = ssub.s32 %s22, %s34
      %s36 = ssub.s32 %s23, %s30
      %s37 = sor.u32 %s35, %s36
      %p38 = scmp.eq.s32.totalorder %s37, 0
      %s40 = sadd.s32 %s39, 1
      %s41 = scalar_select %p38, %s39, %s40
      %p44 = pneg %p38
      %p45 = scmp.eq.s32.totalorder %s15, 1
      %p46 = por %p44, %p45
      %p47 = scmp.ne.s32.totalorder %s39, %s42
      %p48 = scmp.eq.s32.totalorder %s15, 0
      %p49 = por %p47, %p48
      %p50 = scmp.ne.s32.totalorder %s39, %s42
      %p51 = scmp.eq.s32.totalorder %s20, 1
      %p52 = por %p50, %p51
      %p53 = scmp.ne.s32.totalorder %s42, %s43
      %p54 = scmp.eq.s32.totalorder %s20, 0
      %p55 = por %p53, %p54
      %p56 = scmp.ne.s32.totalorder %s42, %s43
      %p57 = scmp.eq.s32.totalorder %s21, 1
      %p58 = por %p56, %p57
      %p60 = scmp.ne.s32.totalorder %s43, %s59
      %p61 = scmp.eq.s32.totalorder %s21, 0
      %p62 = por %p60, %p61
      %s64 = sadd.s32 %s63, 1
      %p67 = scmp.eq.s32.totalorder %s15, 1
      %p68 = scmp.ne.s32.totalorder %s63, %s65
      %p69 = scmp.eq.s32.totalorder %s15, 0
      %p70 = por %p68, %p69
      %p71 = scmp.ne.s32.totalorder %s63, %s65
      %p72 = scmp.eq.s32.totalorder %s20, 1
      %p73 = por %p71, %p72
      %p74 = scmp.ne.s32.totalorder %s65, %s66
      %p75 = scmp.eq.s32.totalorder %s20, 0
      %p76 = por %p74, %p75
      %p77 = scmp.ne.s32.totalorder %s65, %s66
      %p78 = scmp.eq.s32.totalorder %s21, 1
      %p79 = por %p77, %p78
      %p81 = scmp.ne.s32.totalorder %s66, %s80
      %p82 = scmp.eq.s32.totalorder %s21, 0
      %p83 = por %p81, %p82
      %s85 = sadd.s32 %s84, 1
      %p88 = scmp.eq.s32.totalorder %s15, 1
      %p89 = scmp.ne.s32.totalorder %s84, %s86
      %p90 = scmp.eq.s32.totalorder %s15, 0
      %p91 = por %p89, %p90
      %p92 = scmp.ne.s32.totalorder %s84, %s86
      %p93 = scmp.eq.s32.totalorder %s20, 1
      %p94 = por %p92, %p93
      %p95 = scmp.ne.s32.totalorder %s86, %s87
      %p96 = scmp.eq.s32.totalorder %s20, 0
      %p97 = por %p95, %p96
      %p98 = scmp.ne.s32.totalorder %s86, %s87
      %p99 = scmp.eq.s32.totalorder %s21, 1
      %p100 = por %p98, %p99
      %p102 = scmp.ne.s32.totalorder %s87, %s101
      %p103 = scmp.eq.s32.totalorder %s21, 0
      %p104 = por %p102, %p103
      %s105 = ssub.s32 %s22, %s34
      %s106 = ssub.s32 %s23, %s30
      %s107 = sor.u32 %s105, %s106
      %p108 = scmp.eq.s32.totalorder %s107, 0
      %s110 = sadd.s32 %s109, 1
      %s111 = scalar_select %p108, %s109, %s110
      %p114 = pneg %p108
      %p115 = scmp.eq.s32.totalorder %s15, 1
      %p116 = por %p114, %p115
      %p117 = scmp.ne.s32.totalorder %s109, %s112
      %p118 = scmp.eq.s32.totalorder %s15, 0
      %p119 = por %p117, %p118
      %p120 = scmp.ne.s32.totalorder %s109, %s112
      %p121 = scmp.eq.s32.totalorder %s20, 1
      %p122 = por %p120, %p121
      %p123 = scmp.ne.s32.totalorder %s112, %s113
      %p124 = scmp.eq.s32.totalorder %s20, 0
      %p125 = por %p123, %p124
      %p126 = scmp.ne.s32.totalorder %s112, %s113
      %p127 = scmp.eq.s32.totalorder %s21, 1
      %p128 = por %p126, %p127
      %p130 = scmp.ne.s32.totalorder %s113, %s129
      %p131 = scmp.eq.s32.totalorder %s21, 0
      %p132 = por %p130, %p131
      %p133 = scmp.le.s32.totalorder 1, %s15
      %p134 = scmp.lt.s32.totalorder %s15, 3
      %p135 = pnand %p133, %p134
      %p136 = pneg %p135
      // Predicated region
      $region9: #{tpu_custom_call.1} parent=5 // pred_check
        _
      $region10: #{tpu_custom_call.1} parent=5 // pred_check_branch
        %138 = sbr.rel (%p135) target = $region12
      $region11: #{tpu_custom_call.1} parent=5 // pred_region
        %s139 = ssub.s32 %s15, 1
        // Predicated region
        $region13: #{tpu_custom_call.1} parent=11 // pred_check
          %p140 = pneg %p76
        $region14: #{tpu_custom_call.1} parent=11 // pred_check_branch
          %142 = sbr.rel (%p140) target = $region16
        $region15: #{tpu_custom_call.1} parent=11 // pred_region
          _
        $region16: #{tpu_custom_call.1} parent=11 // pred_fallthru
          _
        // Predicated region
        $region17: #{tpu_custom_call.1} parent=11 // pred_check
          %p143 = pneg %p97
        $region18: #{tpu_custom_call.1} parent=11 // pred_check_branch
          %145 = sbr.rel (%p143) target = $region20
        $region19: #{tpu_custom_call.1} parent=11 // pred_region
          _
        $region20: #{tpu_custom_call.1} parent=11 // pred_fallthru
          _
      $region12: #{tpu_custom_call.1} parent=5 // pred_fallthru
        _
      %p146 = scmp.lt.s32.totalorder %s15, 2
      // Predicated region
      $region21: #{tpu_custom_call.1} parent=5 // pred_check
        %p147 = pneg %p146
      $region22: #{tpu_custom_call.1} parent=5 // pred_check_branch
        %149 = sbr.rel (%p147) target = $region24
      $region23: #{tpu_custom_call.1} parent=5 // pred_region
        // Predicated region
        $region25: #{tpu_custom_call.1} parent=23 // pred_check
          %p150 = pneg %p49
        $region26: #{tpu_custom_call.1} parent=23 // pred_check_branch
          %152 = sbr.rel (%p150) target = $region28
        $region27: #{tpu_custom_call.1} parent=23 // pred_region
          %s153 = sand.u32 %s39, 1
          %s154 = scalar_lea.sflag [#allocation3], %s153
          %s155 = sand.u32 %s39, 1
          %s156 = smul.addr %s155, 32
          %s157 = scalar_lea.vmem [#allocation2], %s156
          %s159 = ssub.s32 512, 512
          %160 = vsyncadd %s154, %s159
          %s161 = smul.addr %s22, 8
          %s162 = sadd.s32 %s23, %s161
          %s163 = smul.addr %s162, 64
          %s164 = scalar_lea.hbm %s0, %s163
          %s165 = sshll.u32 %s157, 4
          %s166 = int_to_ptr.vmem [resolvable:$true] %s165
          %171 = dma.hbm_to_vmem [thread:$0]  %s164, 512, %s166, %s154, 64, 64, 4
        $region28: #{tpu_custom_call.1} parent=23 // pred_fallthru
          _
      $region24: #{tpu_custom_call.1} parent=5 // pred_fallthru
        _
      %p172 = scmp.le.s32.totalorder 1, %s15
      %p173 = scmp.lt.s32.totalorder %s15, 3
      %p174 = pnand %p172, %p173
      %p175 = pneg %p174
      // Predicated region
      $region29: #{tpu_custom_call.1} parent=5 // pred_check
        _
      $region30: #{tpu_custom_call.1} parent=5 // pred_check_branch
        %177 = sbr.rel (%p174) target = $region32
      $region31: #{tpu_custom_call.1} parent=5 // pred_region
        %s178 = ssub.s32 %s15, 1
        %s179 = sand.u32 %s42, 1
        %s180 = scalar_lea.sflag [#allocation3], %s179
        %s181 = sand.u32 %s42, 1
        %s182 = smul.addr %s181, 32
        %s183 = scalar_lea.vmem [#allocation2], %s182
        // Predicated region
        $region33: #{tpu_custom_call.1} parent=31 // pred_check
          %p184 = pneg %p55
        $region34: #{tpu_custom_call.1} parent=31 // pred_check_branch
          %186 = sbr.rel (%p184) target = $region36
        $region35: #{tpu_custom_call.1} parent=31 // pred_region
          %187 = dma.done %s180, 512
        $region36: #{tpu_custom_call.1} parent=31 // pred_fallthru
          _
        %s188 = sand.u32 %s42, 1
        %s189 = scalar_lea.sflag [#allocation3], %s188
        %s190 = sand.u32 %s42, 1
        %s191 = smul.addr %s190, 32
        %s192 = scalar_lea.vmem [#allocation2], %s191
        %p193 = pneg %p55
        %p194 = pneg %p52
        %p195 = pneg %p76
        %p196 = pneg %p73
        %p197 = pneg %p97
        %p198 = pneg %p94
        %p199 = pneg %p125
        %p200 = pneg %p122
        %s201 = sand.u32 %s112, 1
        %s202 = scalar_lea.sflag [#allocation4], %s201
        %s203 = sand.u32 %s112, 1
        %s204 = smul.addr %s203, 32
        %s205 = scalar_lea.vmem [#allocation5], %s204
        %v207 = vld [vmem:[%s1] sm:$0xf]
        %v208 = vld [vmem:[%s1 + $0x4] sm:$0xf]
        %v209 = vld [vmem:[%s1 + $0x8] sm:$0xf]
        %v210 = vld [vmem:[%s1 + $0xc] sm:$0xf]
        %v211 = vld [vmem:[%s2] sm:$0xff]
        %v212 = vld [vmem:[%s2 + $0x8] sm:$0xff]
        %v213 = vld [vmem:[%s2 + $0x10] sm:$0xff]
        %v214 = vld [vmem:[%s2 + $0x18] sm:$0xff]
        %216 = vset.pattern.permute.xlu0 0
        %217 = vperm.xlu0 %216, %v211
        %v218 = vpop.permute.xlu0 %217
        %221 = vset.pattern.permute.xlu0 0
        %222 = vperm.xlu0 %221, %v212
        %v223 = vpop.permute.xlu0 %222
        %226 = vset.pattern.permute.xlu0 0
        %227 = vperm.xlu0 %226, %v213
        %v228 = vpop.permute.xlu0 %227
        %231 = vset.pattern.permute.xlu0 0
        %232 = vperm.xlu0 %231, %v214
        %v233 = vpop.permute.xlu0 %232
        %v235 = vld [vmem:[%s183] sm:$0xf]
        %v236 = vld [vmem:[%s183 + $0x4] sm:$0xf]
        %v237 = vld [vmem:[%s183 + $0x8] sm:$0xf]
        %v238 = vld [vmem:[%s183 + $0xc] sm:$0xf]
        %v239 = vld [vmem:[%s183 + $0x10] sm:$0xf]
        %v240 = vld [vmem:[%s183 + $0x14] sm:$0xf]
        %v241 = vld [vmem:[%s183 + $0x18] sm:$0xf]
        %v242 = vld [vmem:[%s183 + $0x1c] sm:$0xf]
        %v247 = vunpack.c.l.b16 %v207
        %v248 = vunpack.c.l.b16 %v208
        %v249 = vunpack.c.l.b16 %v209
        %v250 = vunpack.c.l.b16 %v210
        %v251 = vpack.c.b16 %v248, %v247
        %v252 = vpack.c.b16 %v250, %v249
        %v261 = vunpack.c.l.b16 %v235
        %v262 = vunpack.c.l.b16 %v236
        %v263 = vunpack.c.l.b16 %v237
        %v264 = vunpack.c.l.b16 %v238
        %v265 = vunpack.c.l.b16 %v239
        %v266 = vunpack.c.l.b16 %v240
        %v267 = vunpack.c.l.b16 %v241
        %v268 = vunpack.c.l.b16 %v242
        %v269 = vpack.c.b16 %v262, %v261
        %v270 = vpack.c.b16 %v264, %v263
        %v271 = vpack.c.b16 %v266, %v265
        %v272 = vpack.c.b16 %v268, %v267
        %vm277 = vcmask 523264
        %v279 = vsel %vm277, %v251, 0
        %v282 = vsel %vm277, %v252, 0
        %284 = vmatprep.subr.bf16.mxu0 0
        %285 = vmatpush1.bf16.msra.mxu0 %v269
        %286 = vmatprep.subr.bf16.mxu0 0
        %287 = vmatpush1.bf16.msra.mxu0 %v270
        %288 = vmatprep.subr.bf16.mxu0 0
        %289 = vmatpush1.bf16.msra.mxu0 %v271
        %290 = vmatprep.subr.bf16.mxu0 0
        %291 = vmatpush1.bf16.msra.mxu0 %v272
        %292 = vmatprep.subr.bf16.mxu0 0
        %293 = vmatpush1.bf16.msra.mxu0 0
        %294 = vmatprep.subr.bf16.mxu0 0
        %295 = vmatpush1.bf16.msra.mxu0 0
        %296 = vmatprep.subr.bf16.mxu0 0
        %297 = vmatpush1.bf16.msra.mxu0 0
        %298 = vmatprep.subr.bf16.mxu0 0
        %299 = vmatpush1.bf16.msra.mxu0 0
        %300 = vmatprep.subr.bf16.mxu0 0
        %301 = vmatpush1.bf16.msra.mxu0 0
        %302 = vmatprep.subr.bf16.mxu0 0
        %303 = vmatpush1.bf16.msra.mxu0 0
        %304 = vmatprep.subr.bf16.mxu0 0
        %305 = vmatpush1.bf16.msra.mxu0 0
        %306 = vmatprep.subr.bf16.mxu0 0
        %307 = vmatpush1.bf16.msra.mxu0 0
        %308 = vmatprep.subr.bf16.mxu0 0
        %309 = vmatpush1.bf16.msra.mxu0 0
        %310 = vmatprep.subr.bf16.mxu0 0
        %311 = vmatpush1.bf16.msra.mxu0 0
        %312 = vmatprep.subr.bf16.mxu0 0
        %313 = vmatpush1.bf16.msra.mxu0 0
        %314 = vmatprep.subr.bf16.mxu0 0
        %315 = vmatpush1.bf16.msra.mxu0 0
        %316 = vmatprep.mubr.bf16.mxu0 0
        %317 = vmatmul.mubr.bf16.gmra.mrb[0].mxu0 %v279
        %v318 = vpop.f32.mrb[0].mxu0
        %v319 = vadd.f32 %v218, %v318
        %v320 = vpop.f32.mrb[0].mxu0
        %v321 = vpop.f32.mrb[0].mxu0
        %v322 = vadd.f32 %v223, %v321
        %v323 = vpop.f32.mrb[0].mxu0
        %324 = vmatprep.mubr.bf16.mxu0 0
        %325 = vmatmul.mubr.bf16.gmra.mrb[0].mxu0 %v282
        %v326 = vpop.f32.mrb[0].mxu0
        %v327 = vadd.f32 %v228, %v326
        %v328 = vpop.f32.mrb[0].mxu0
        %v329 = vpop.f32.mrb[0].mxu0
        %v330 = vadd.f32 %v233, %v329
        %v331 = vpop.f32.mrb[0].mxu0
        %332 = vdwg.mxu0
        %333 = vst [vmem:[%s205] sm:$0xff] %v319
        %334 = vst [vmem:[%s205 + $0x8] sm:$0xff] %v322
        %335 = vst [vmem:[%s205 + $0x10] sm:$0xff] %v327
        %336 = vst [vmem:[%s205 + $0x18] sm:$0xff] %v330
        %s337 = sand.u32 %s112, 1
        %s338 = scalar_lea.sflag [#allocation4], %s337
        %s339 = sand.u32 %s112, 1
        %s340 = smul.addr %s339, 32
        %s341 = scalar_lea.vmem [#allocation5], %s340
        // Predicated region
        $region37: #{tpu_custom_call.1} parent=31 // pred_check
          %p342 = pneg %p122
        $region38: #{tpu_custom_call.1} parent=31 // pred_check_branch
          %344 = sbr.rel (%p342) target = $region40
        $region39: #{tpu_custom_call.1} parent=31 // pred_region
          %s346 = ssub.s32 512, 512
          %347 = vsyncadd %s338, %s346
          %s348 = smul.addr %s24, 4
          %s349 = sadd.s32 %s25, %s348
          %s350 = smul.addr %s349, 128
          %s351 = scalar_lea.hbm %s3, %s350
          %s352 = sshll.u32 %s341, 4
          %s353 = int_to_ptr.vmem [resolvable:$true] %s352
          %358 = dma.vmem_to_hbm [thread:$0]  %s353, 512, %s351, %s338, 128, 128, 8
        $region40: #{tpu_custom_call.1} parent=31 // pred_fallthru
          _
      $region32: #{tpu_custom_call.1} parent=5 // pred_fallthru
        _
      %p359 = scmp.le.s32.totalorder 2, %s15
      // Predicated region
      $region41: #{tpu_custom_call.1} parent=5 // pred_check
        %p360 = pneg %p359
      $region42: #{tpu_custom_call.1} parent=5 // pred_check_branch
        %362 = sbr.rel (%p360) target = $region44
      $region43: #{tpu_custom_call.1} parent=5 // pred_region
        %s363 = ssub.s32 %s15, 2
        // Predicated region
        $region45: #{tpu_custom_call.1} parent=43 // pred_check
          %p364 = pneg %p128
        $region46: #{tpu_custom_call.1} parent=43 // pred_check_branch
          %366 = sbr.rel (%p364) target = $region48
        $region47: #{tpu_custom_call.1} parent=43 // pred_region
          %s367 = sand.u32 %s113, 1
          %s368 = scalar_lea.sflag [#allocation4], %s367
          %s369 = sand.u32 %s113, 1
          %s370 = smul.addr %s369, 32
          %s371 = scalar_lea.vmem [#allocation5], %s370
          %372 = dma.done %s368, 512
        $region48: #{tpu_custom_call.1} parent=43 // pred_fallthru
          _
      $region44: #{tpu_custom_call.1} parent=5 // pred_fallthru
        _
    $region6: #{tpu_custom_call.1} parent=1 // loop_footer
      %s19 = sadd.s32 1, %s15
    $region7: #{tpu_custom_call.1} parent=1 // loop_footer_branch
      %14 = sbr.rel target = $region3
    $region8: #{tpu_custom_call.1} parent=1 // loop_exit
      _
    %373 = vsyncpa [#allocation3], 1
    %s374 = scalar_lea.sflag [#allocation3], 1
    %375 = vsyncpa %s374, 1
    %376 = vsyncpa [#allocation4], 1
    %s377 = scalar_lea.sflag [#allocation4], 1
    %378 = vsyncpa %s377, 1

</llo_original>
